<compile_context>
chip_gen: v7x
topology: tpu7x:2x2x1
jax: 0.10.0
libtpu: 0.0.40
codegen_flags: <defaults>
</compile_context>

<pallas_src>
import functools

import jax
import jax.numpy as jnp
import numpy as np
from jax import lax
from jax.experimental import pallas as pl
from jax.experimental.pallas import tpu as pltpu

# ------------------------------- small demo config ---------------------------
B = 8            # batch rows (fills one sublane tile)
V = 2048         # vocabulary size (small demo; real vocab ~100-130K works the same)
MAX_TILE = 16384 # vocab tile cap: B=8 f32 double-buffered -> ~1 MiB of VMEM
NUM_CORES = 2    # vocab split across TensorCores (v7x megacore); serial & correct elsewhere
BIG_IDX = np.iinfo(np.int32).max


# --------------------------------- kernel ------------------------------------
def greedy_head_kernel(logits_ref, pmax_ref, pidx_ref, max_sc, idx_sc):
    """Grid = (core, vocab_step). Each (core) reduces its vocab slice into a resident
    (max value, argmax index) accumulator and emits one per-core partial at the end."""
    c = pl.program_id(0)
    k = pl.program_id(1)
    nk = pl.num_programs(1)
    tv = logits_ref.shape[-1]

    @pl.when(k == 0)
    def _init():
        max_sc[...] = jnp.full_like(max_sc, -jnp.inf)
        idx_sc[...] = jnp.zeros_like(idx_sc)

    # Native dtype (f32 or bf16): per-tile max / equality / first-index in the input dtype.
    vals = logits_ref[...]                                        # (B, TV)
    tile_max = jnp.max(vals, axis=-1, keepdims=True)              # (B, 1)

    # Tile-local iota is loop-invariant; the vocab offset is a scalar add on (B,1).
    col = lax.broadcasted_iota(jnp.int32, vals.shape, 1)          # (B, TV) 0..TV-1
    tile_idx = jnp.min(jnp.where(vals == tile_max, col, BIG_IDX),
                       axis=-1, keepdims=True)                    # (B, 1) int32
    tile_idx = tile_idx + (c * nk + k) * tv                       # global vocab index

    # Cross-tile accumulate in f32; strict '>' keeps the earliest index on ties because
    # the vocab is walked in increasing order within a core.
    tile_max = tile_max.astype(jnp.float32)
    better = tile_max > max_sc[...]
    max_sc[...] = jnp.where(better, tile_max, max_sc[...])
    idx_sc[...] = jnp.where(better, tile_idx, idx_sc[...])

    @pl.when(k == nk - 1)
    def _finalize():
        pmax_ref[0] = max_sc[...]
        pidx_ref[0] = idx_sc[...]


# -------------------------------- wrapper -------------------------------------
def _pick_tile(per_core_v, max_tile):
    """Largest lane-aligned tile <= max_tile that divides the per-core vocab slice."""
    if per_core_v <= max_tile:
        return per_core_v
    tv = (max_tile // 128) * 128
    while tv >= 128:
        if per_core_v % tv == 0:
            return tv
        tv -= 128
    return per_core_v  # unreachable when per_core_v % 128 == 0


@functools.partial(jax.jit, static_argnames=("num_cores", "max_tile"))
def greedy_head(m_logits, num_cores=NUM_CORES, max_tile=MAX_TILE):
    b, v = m_logits.shape

    # Fall back to a single core if the vocab does not split into lane-aligned halves.
    if v % (num_cores * 128) != 0:
        num_cores = 1
    per_core_v = v // num_cores
    if per_core_v % 128 == 0:
        tv = _pick_tile(per_core_v, max_tile)
    else:
        tv = per_core_v  # full-extent block (legal even if not a multiple of 128)
    steps = per_core_v // tv

    pmax, pidx = pl.pallas_call(
        greedy_head_kernel,
        out_shape=(jax.ShapeDtypeStruct((num_cores, b, 1), jnp.float32),
                   jax.ShapeDtypeStruct((num_cores, b, 1), jnp.int32)),
        grid=(num_cores, steps),
        in_specs=[pl.BlockSpec((b, tv), lambda c, k: (0, c * steps + k))],
        out_specs=(pl.BlockSpec((1, b, 1), lambda c, k: (c, 0, 0)),
                   pl.BlockSpec((1, b, 1), lambda c, k: (c, 0, 0))),
        scratch_shapes=[pltpu.VMEM((b, 1), jnp.float32),   # running max value
                        pltpu.VMEM((b, 1), jnp.int32)],    # running argmax
        compiler_params=pltpu.CompilerParams(
            dimension_semantics=("parallel", "arbitrary"),  # core split x vocab reduction
            vmem_limit_bytes=32 * 1024 * 1024),             # headroom for large tiles on v5e
    )(m_logits)

    # Combine the per-core partials (strict '>' so the lower-vocab core wins ties).
    best_v, best_i = pmax[0], pidx[0]
    for cc in range(1, num_cores):
        better = pmax[cc] > best_v
        best_i = jnp.where(better, pidx[cc], best_i)
        best_v = jnp.where(better, pmax[cc], best_v)
    return best_i                                            # (B, 1) int32 token ids


# ----------------------------------- main --------------------------------------
if __name__ == "__main__":
    key = jax.random.PRNGKey(0)
    m_logits = jax.random.normal(key, (B, V), jnp.float32)

    # row 0: cross-core tie (both global maxima) -> lower index 700 must win.
    m_logits = m_logits.at[0, 700].set(100.0).at[0, 1500].set(100.0)
    # row 1: max near the end of the vocab (last tile of core 1).
    m_logits = m_logits.at[1, V - 3].set(50.0)
    # row 2: within-tile tie -> lower index 10 must win.
    m_logits = m_logits.at[2, 10].set(100.0).at[2, 20].set(100.0)

    token = greedy_head(m_logits)
    jax.block_until_ready(token)

    ref = jnp.argmax(m_logits.astype(jnp.float32), axis=-1).astype(jnp.int32)[:, None]
    np.testing.assert_array_equal(np.asarray(token), np.asarray(ref))
    assert int(token[0, 0]) == 700
    assert int(token[1, 0]) == V - 3
    assert int(token[2, 0]) == 10

    # bf16 streaming path (half the HBM bytes when the lm_head emits bf16).
    m_bf16 = m_logits.astype(jnp.bfloat16)
    token_bf16 = greedy_head(m_bf16)
    jax.block_until_ready(token_bf16)
    ref_bf16 = jnp.argmax(m_bf16.astype(jnp.float32), axis=-1).astype(jnp.int32)[:, None]
    np.testing.assert_array_equal(np.asarray(token_bf16), np.asarray(ref_bf16))

    print("KERNEL_OK")
</pallas_src>

<mosaic_0001>
module attributes {stable_mosaic.version = 11 : i64} {
  func.func @greedy_head_kernel(%arg0: i32, %arg1: i32, %arg2: memref<8x1024xf32, #tpu.memory_space<vmem>>, %arg3: memref<1x8x1xf32, #tpu.memory_space<vmem>>, %arg4: memref<1x8x1xi32, #tpu.memory_space<vmem>>, %arg5: memref<8x1xf32, #tpu.memory_space<vmem>>, %arg6: memref<8x1xi32, #tpu.memory_space<vmem>>) attributes {dimension_semantics = [#tpu.dimension_semantics<parallel>, #tpu.dimension_semantics<arbitrary>], iteration_bounds = array<i64: 2, 1>, scalar_prefetch = 0 : i64, scratch_operands = 2 : i64, tpu.core_type = #tpu.core_type<tc>, window_params = [{transform_indices = @transform_0, window_bounds = array<i64: 8, 1024>}, {transform_indices = @transform_1, window_bounds = array<i64: 1, 8, 1>}, {transform_indices = @transform_2, window_bounds = array<i64: 1, 8, 1>}]} {
    %c0_i32 = arith.constant 0 : i32
    %0 = arith.cmpi eq, %arg1, %c0_i32 : i32
    %1 = arith.extui %0 : i1 to i32
    %c0_i32_0 = arith.constant 0 : i32
    %2 = arith.cmpi ne, %1, %c0_i32_0 : i32
    scf.if %2 {
      %cst_15 = arith.constant 0xFF800000 : f32
      %29 = vector.broadcast %cst_15 : f32 to vector<8x1xf32>
      %c0_16 = arith.constant 0 : index
      %c0_17 = arith.constant 0 : index
      %30 = vector.load %arg5[%c0_16, %c0_17] : memref<8x1xf32, #tpu.memory_space<vmem>>, vector<8x1xf32>
      tpu.vector_store %arg5[%c0_16, %c0_17], %29 {strides = array<i32>} : memref<8x1xf32, #tpu.memory_space<vmem>>, vector<8x1xf32>,
      %c0_i32_18 = arith.constant 0 : i32
      %31 = vector.broadcast %c0_i32_18 : i32 to vector<8x1xi32>
      %c0_19 = arith.constant 0 : index
      %c0_20 = arith.constant 0 : index
      %32 = vector.load %arg6[%c0_19, %c0_20] : memref<8x1xi32, #tpu.memory_space<vmem>>, vector<8x1xi32>
      tpu.vector_store %arg6[%c0_19, %c0_20], %31 {strides = array<i32>} : memref<8x1xi32, #tpu.memory_space<vmem>>, vector<8x1xi32>,
    } else {
    }
    %c0 = arith.constant 0 : index
    %c0_1 = arith.constant 0 : index
    %3 = vector.load %arg2[%c0, %c0_1] : memref<8x1024xf32, #tpu.memory_space<vmem>>, vector<8x1024xf32>
    %cst = arith.constant dense<0xFF800000> : vector<8xf32>
    %4 = vector.multi_reduction <maximumf>, %3, %cst [1] : vector<8x1024xf32> to vector<8xf32>
    %5 = vector.shape_cast %4 : vector<8xf32> to vector<8x1xf32>
    %6 = tpu.iota {dimensions = array<i32: 1>} : vector<8x1024xi32>
    %7 = vector.broadcast %5 : vector<8x1xf32> to vector<8x1024xf32>
    %8 = arith.cmpf oeq, %3, %7 : vector<8x1024xf32>
    %c2147483647_i32 = arith.constant 2147483647 : i32
    %9 = vector.broadcast %c2147483647_i32 : i32 to vector<8x1024xi32>
    %10 = arith.select %8, %6, %9 : vector<8x1024xi1>, vector<8x1024xi32>
    %cst_2 = arith.constant dense<2147483647> : vector<8xi32>
    %11 = vector.multi_reduction <minsi>, %10, %cst_2 [1] : vector<8x1024xi32> to vector<8xi32>
    %12 = vector.shape_cast %11 : vector<8xi32> to vector<8x1xi32>
    %c1_i32 = arith.constant 1 : i32
    %13 = arith.muli %arg0, %c1_i32 : i32
    %14 = arith.addi %13, %arg1 : i32
    %c1024_i32 = arith.constant 1024 : i32
    %15 = arith.muli %14, %c1024_i32 : i32
    %16 = vector.broadcast %15 : i32 to vector<8x1xi32>
    %17 = arith.addi %12, %16 : vector<8x1xi32>
    %c0_3 = arith.constant 0 : index
    %c0_4 = arith.constant 0 : index
    %18 = vector.load %arg5[%c0_3, %c0_4] : memref<8x1xf32, #tpu.memory_space<vmem>>, vector<8x1xf32>
    %19 = arith.cmpf ogt, %5, %18 : vector<8x1xf32>
    %c0_5 = arith.constant 0 : index
    %c0_6 = arith.constant 0 : index
    %20 = vector.load %arg5[%c0_5, %c0_6] : memref<8x1xf32, #tpu.memory_space<vmem>>, vector<8x1xf32>
    %21 = arith.select %19, %5, %20 : vector<8x1xi1>, vector<8x1xf32>
    %c0_7 = arith.constant 0 : index
    %c0_8 = arith.constant 0 : index
    %22 = vector.load %arg5[%c0_7, %c0_8] : memref<8x1xf32, #tpu.memory_space<vmem>>, vector<8x1xf32>
    tpu.vector_store %arg5[%c0_7, %c0_8], %21 {strides = array<i32>} : memref<8x1xf32, #tpu.memory_space<vmem>>, vector<8x1xf32>,
    %c0_9 = arith.constant 0 : index
    %c0_10 = arith.constant 0 : index
    %23 = vector.load %arg6[%c0_9, %c0_10] : memref<8x1xi32, #tpu.memory_space<vmem>>, vector<8x1xi32>
    %24 = arith.select %19, %17, %23 : vector<8x1xi1>, vector<8x1xi32>
    %c0_11 = arith.constant 0 : index
    %c0_12 = arith.constant 0 : index
    %25 = vector.load %arg6[%c0_11, %c0_12] : memref<8x1xi32, #tpu.memory_space<vmem>>, vector<8x1xi32>
    tpu.vector_store %arg6[%c0_11, %c0_12], %24 {strides = array<i32>} : memref<8x1xi32, #tpu.memory_space<vmem>>, vector<8x1xi32>,
    %c0_i32_13 = arith.constant 0 : i32
    %26 = arith.cmpi eq, %arg1, %c0_i32_13 : i32
    %27 = arith.extui %26 : i1 to i32
    %c0_i32_14 = arith.constant 0 : i32
    %28 = arith.cmpi ne, %27, %c0_i32_14 : i32
    scf.if %28 {
      %c0_15 = arith.constant 0 : index
      %c0_16 = arith.constant 0 : index
      %29 = vector.load %arg5[%c0_15, %c0_16] : memref<8x1xf32, #tpu.memory_space<vmem>>, vector<8x1xf32>
      %c0_17 = arith.constant 0 : index
      %c0_18 = arith.constant 0 : index
      %c0_19 = arith.constant 0 : index
      %30 = vector.load %arg3[%c0_17, %c0_18, %c0_19] : memref<1x8x1xf32, #tpu.memory_space<vmem>>, vector<1x8x1xf32>
      %31 = vector.shape_cast %30 : vector<1x8x1xf32> to vector<8x1xf32>
      %32 = vector.shape_cast %29 : vector<8x1xf32> to vector<1x8x1xf32>
      tpu.vector_store %arg3[%c0_17, %c0_18, %c0_19], %32 {strides = array<i32>} : memref<1x8x1xf32, #tpu.memory_space<vmem>>, vector<1x8x1xf32>,
      %c0_20 = arith.constant 0 : index
      %c0_21 = arith.constant 0 : index
      %33 = vector.load %arg6[%c0_20, %c0_21] : memref<8x1xi32, #tpu.memory_space<vmem>>, vector<8x1xi32>
      %c0_22 = arith.constant 0 : index
      %c0_23 = arith.constant 0 : index
      %c0_24 = arith.constant 0 : index
      %34 = vector.load %arg4[%c0_22, %c0_23, %c0_24] : memref<1x8x1xi32, #tpu.memory_space<vmem>>, vector<1x8x1xi32>
      %35 = vector.shape_cast %34 : vector<1x8x1xi32> to vector<8x1xi32>
      %36 = vector.shape_cast %33 : vector<8x1xi32> to vector<1x8x1xi32>
      tpu.vector_store %arg4[%c0_22, %c0_23, %c0_24], %36 {strides = array<i32>} : memref<1x8x1xi32, #tpu.memory_space<vmem>>, vector<1x8x1xi32>,
    } else {
    }
    return
  }
  func.func @transform_0(%arg0: i32, %arg1: i32) -> (i32, i32) {
    %c1_i32 = arith.constant 1 : i32
    %0 = arith.muli %arg0, %c1_i32 : i32
    %1 = arith.addi %0, %arg1 : i32
    %c0_i32 = arith.constant 0 : i32
    %c0_i32_0 = arith.constant 0 : i32
    return %c0_i32, %1 : i32, i32
  }
  func.func @transform_1(%arg0: i32, %arg1: i32) -> (i32, i32, i32) {
    %c0_i32 = arith.constant 0 : i32
    %c0_i32_0 = arith.constant 0 : i32
    %c0_i32_1 = arith.constant 0 : i32
    return %arg0, %c0_i32, %c0_i32_0 : i32, i32, i32
  }
  func.func @transform_2(%arg0: i32, %arg1: i32) -> (i32, i32, i32) {
    %c0_i32 = arith.constant 0 : i32
    %c0_i32_0 = arith.constant 0 : i32
    %c0_i32_1 = arith.constant 0 : i32
    return %arg0, %c0_i32, %c0_i32_0 : i32, i32, i32
  }
}

</mosaic_0001>

<llo_original>
// kernel: greedy_head.1
$region0: #{greedy_head.1}
  #allocation0 [shape = 'u32[]', space=smem, size = 0x4, offset = 0x4, fixed_abs, tag = 'smem constant byte address 0x4 - core index']
  #allocation1 [shape = 'u32[144,128]{1,0:T(1,128)}', space=vmem, size = 0x12000, scoped, tag = 'internal scratch']
  #allocation2 [shape = 'f32[8,1]{1,0:T(8,128)}', space=vmem, size = 0x1000, scoped, tag = 'scratch operand']
  #allocation3 [shape = 's32[8,1]{1,0:T(8,128)}', space=vmem, size = 0x1000, scoped, tag = 'scratch operand']
  %s0 = inlined_call_operand.hbm [shape: f32[8,2048], index: 0, kind: input, shape index: {}]
  %s1 = inlined_call_operand.vmem [shape: f32[2,8,1], index: 1, kind: output, shape index: {0}]
  %s2 = inlined_call_operand.vmem [shape: s32[2,8,1], index: 2, kind: output, shape index: {1}]
  %3 = xla_tuple %s1, %s2
  %s4 = sld [smem:[#allocation0]]
  $region57: #{greedy_head.1} parent=0
    _
  %s6 = ssub.s32 1, %s4
  %s7 = scalar_select 0, %s6, %s4
  $region1: #{greedy_head.1} parent=0
    #allocation4 [shape = 'u8[65536]{0}', space=vmem, size = 0x10000, scoped, tag = 'input window, operand 0']
    #allocation5 [shape = 's32[2]{0}', space=sflag, size = 0x8, scoped, tag = 'scoped memory for greedy_head.1']
    %8 = vsyncpa [#allocation5], 0
    %s9 = scalar_lea.sflag [#allocation5], 1
    %10 = vsyncpa %s9, 0
    loop: start=0, step=1, limit=4
    $region2: #{greedy_head.1} parent=1 // loop_pre_header
      _
    $region3: #{greedy_head.1} parent=1 // loop_header
      %s12 = sphi 0, %s16
      %p13 = scmp.ge.s32.totalorder %s12, 4
      %s19 = sphi 0, %s31
      %s20 = sphi 0, %s27
      %s21 = sphi 0, %s19
      %s22 = sphi 0, %s20
      %s23 = sphi 0, %s21
      %s24 = sphi 0, %s22
      %s36 = sphi 0, %s38
      %s39 = sphi 0, %s36
      %s40 = sphi 0, %s39
      %s56 = sphi 0, %s40
      %s62 = sphi 0, %s64
      %s65 = sphi 0, %s62
      %s66 = sphi 0, %s65
      %s82 = sphi 0, %s66
      %s88 = sphi 0, %s90
      %s91 = sphi 0, %s88
      %s92 = sphi 0, %s91
      %s108 = sphi 0, %s92
    $region4: #{greedy_head.1} parent=1 // loop_header_branch
      %15 = sbr.rel (%p13) target = $region8
    $region5: #{greedy_head.1} parent=1 // loop_body
      %s17 = ssub.s32 %s12, 1
      %s18 = ssub.s32 %s12, 2
      %s25 = sadd.s32 1, %s20
      %p26 = scmp.ge.s32.totalorder %s25, 1
      %s27 = scalar_select %p26, 0, %s25
      %s28 = sadd.s32 1, %s19
      %s29 = scalar_select %p26, %s28, %s19
      %p30 = scmp.ge.s32.totalorder %s29, 2
      %s31 = scalar_select %p30, 0, %s29
      %s32 = sadd.s32 %s19, %s20
      %s33 = sadd.s32 %s31, %s27
      %s34 = ssub.s32 %s32, %s33
      %p35 = scmp.eq.s32.totalorder %s34, 0
      %s37 = sadd.s32 %s36, 1
      %s38 = scalar_select %p35, %s36, %s37
      %p41 = pneg %p35
      %p42 = scmp.eq.s32.totalorder %s12, 1
      %p43 = por %p41, %p42
      %p44 = scmp.ne.s32.totalorder %s36, %s39
      %p45 = scmp.eq.s32.totalorder %s12, 0
      %p46 = por %p44, %p45
      %p47 = scmp.ne.s32.totalorder %s36, %s39
      %p48 = scmp.eq.s32.totalorder %s17, 1
      %p49 = por %p47, %p48
      %p50 = scmp.ne.s32.totalorder %s39, %s40
      %p51 = scmp.eq.s32.totalorder %s17, 0
      %p52 = por %p50, %p51
      %p53 = scmp.ne.s32.totalorder %s39, %s40
      %p54 = scmp.eq.s32.totalorder %s18, 1
      %p55 = por %p53, %p54
      %p57 = scmp.ne.s32.totalorder %s40, %s56
      %p58 = scmp.eq.s32.totalorder %s18, 0
      %p59 = por %p57, %p58
      %s60 = ssub.s32 %s19, %s31
      %p61 = scmp.eq.s32.totalorder %s60, 0
      %s63 = sadd.s32 %s62, 1
      %s64 = scalar_select %p61, %s62, %s63
      %p67 = pneg %p61
      %p68 = scmp.eq.s32.totalorder %s12, 1
      %p69 = por %p67, %p68
      %p70 = scmp.ne.s32.totalorder %s62, %s65
      %p71 = scmp.eq.s32.totalorder %s12, 0
      %p72 = por %p70, %p71
      %p73 = scmp.ne.s32.totalorder %s62, %s65
      %p74 = scmp.eq.s32.totalorder %s17, 1
      %p75 = por %p73, %p74
      %p76 = scmp.ne.s32.totalorder %s65, %s66
      %p77 = scmp.eq.s32.totalorder %s17, 0
      %p78 = por %p76, %p77
      %p79 = scmp.ne.s32.totalorder %s65, %s66
      %p80 = scmp.eq.s32.totalorder %s18, 1
      %p81 = por %p79, %p80
      %p83 = scmp.ne.s32.totalorder %s66, %s82
      %p84 = scmp.eq.s32.totalorder %s18, 0
      %p85 = por %p83, %p84
      %s86 = ssub.s32 %s19, %s31
      %p87 = scmp.eq.s32.totalorder %s86, 0
      %s89 = sadd.s32 %s88, 1
      %s90 = scalar_select %p87, %s88, %s89
      %p93 = pneg %p87
      %p94 = scmp.eq.s32.totalorder %s12, 1
      %p95 = por %p93, %p94
      %p96 = scmp.ne.s32.totalorder %s88, %s91
      %p97 = scmp.eq.s32.totalorder %s12, 0
      %p98 = por %p96, %p97
      %p99 = scmp.ne.s32.totalorder %s88, %s91
      %p100 = scmp.eq.s32.totalorder %s17, 1
      %p101 = por %p99, %p100
      %p102 = scmp.ne.s32.totalorder %s91, %s92
      %p103 = scmp.eq.s32.totalorder %s17, 0
      %p104 = por %p102, %p103
      %p105 = scmp.ne.s32.totalorder %s91, %s92
      %p106 = scmp.eq.s32.totalorder %s18, 1
      %p107 = por %p105, %p106
      %p109 = scmp.ne.s32.totalorder %s92, %s108
      %p110 = scmp.eq.s32.totalorder %s18, 0
      %p111 = por %p109, %p110
      %p112 = scmp.le.s32.totalorder 1, %s12
      %p113 = scmp.lt.s32.totalorder %s12, 3
      %p114 = pnand %p112, %p113
      %p115 = pneg %p114
      // Predicated region
      $region9: #{greedy_head.1} parent=5 // pred_check
        _
      $region10: #{greedy_head.1} parent=5 // pred_check_branch
        %117 = sbr.rel (%p114) target = $region12
      $region11: #{greedy_head.1} parent=5 // pred_region
        %s118 = ssub.s32 %s12, 1
      $region12: #{greedy_head.1} parent=5 // pred_fallthru
        _
      %p119 = scmp.lt.s32.totalorder %s12, 2
      // Predicated region
      $region13: #{greedy_head.1} parent=5 // pred_check
        %p120 = pneg %p119
      $region14: #{greedy_head.1} parent=5 // pred_check_branch
        %122 = sbr.rel (%p120) target = $region16
      $region15: #{greedy_head.1} parent=5 // pred_region
        // Predicated region
        $region17: #{greedy_head.1} parent=15 // pred_check
          %p123 = pneg %p46
        $region18: #{greedy_head.1} parent=15 // pred_check_branch
          %125 = sbr.rel (%p123) target = $region20
        $region19: #{greedy_head.1} parent=15 // pred_region
          %s126 = sand.u32 %s36, 1
          %s127 = scalar_lea.sflag [#allocation5], %s126
          %s128 = sand.u32 %s36, 1
          %s129 = smul.addr %s128, 64
          %s130 = scalar_lea.vmem [#allocation4], %s129
          %s131 = sadd.s32 %s19, %s20
          %s132 = smul.u32 8, %s131
          %s134 = ssub.s32 1024, 1024
          %135 = vsyncadd %s127, %s134
          %s136 = smul.addr %s132, 128
          %s137 = scalar_lea.hbm %s0, %s136
          %s139 = sshll.u32 %s130, 4
          %s140 = int_to_ptr.vmem [resolvable:$true] %s139
          %142 = dma.hbm_to_vmem [thread:$0]  %s137, 1024, %s140, %s127
        $region20: #{greedy_head.1} parent=15 // pred_fallthru
          _
      $region16: #{greedy_head.1} parent=5 // pred_fallthru
        _
      %p143 = scmp.le.s32.totalorder 1, %s12
      %p144 = scmp.lt.s32.totalorder %s12, 3
      %p145 = pnand %p143, %p144
      %p146 = pneg %p145
      // Predicated region
      $region21: #{greedy_head.1} parent=5 // pred_check
        _
      $region22: #{greedy_head.1} parent=5 // pred_check_branch
        %148 = sbr.rel (%p145) target = $region24
      $region23: #{greedy_head.1} parent=5 // pred_region
        %s149 = ssub.s32 %s12, 1
        %s150 = sand.u32 %s39, 1
        %s151 = scalar_lea.sflag [#allocation5], %s150
        %s152 = sand.u32 %s39, 1
        %s153 = smul.addr %s152, 64
        %s154 = scalar_lea.vmem [#allocation4], %s153
        // Predicated region
        $region25: #{greedy_head.1} parent=23 // pred_check
          %p155 = pneg %p52
        $region26: #{greedy_head.1} parent=23 // pred_check_branch
          %157 = sbr.rel (%p155) target = $region28
        $region27: #{greedy_head.1} parent=23 // pred_region
          %158 = dma.done %s151, 1024
        $region28: #{greedy_head.1} parent=23 // pred_fallthru
          _
        %s159 = sand.u32 %s39, 1
        %s160 = scalar_lea.sflag [#allocation5], %s159
        %s161 = sand.u32 %s39, 1
        %s162 = smul.addr %s161, 64
        %s163 = scalar_lea.vmem [#allocation4], %s162
        %p164 = pneg %p52
        %p165 = pneg %p49
        %p166 = pneg %p78
        %p167 = pneg %p75
        %p168 = scmp.lt.s32.totalorder %s21, 1
        %s169 = scalar_select %p168, %s21, 1
        %s170 = smul.addr %s169, 8
        %s171 = scalar_lea.vmem %s1, %s170
        %p172 = pneg %p104
        %p173 = pneg %p101
        %p174 = scmp.lt.s32.totalorder %s21, 1
        %s175 = scalar_select %p174, %s21, 1
        %s176 = smul.addr %s175, 8
        %s177 = scalar_lea.vmem %s2, %s176
        %s178 = sadd.s32 %s21, %s22
        %s179 = smul.u32 8, %s178
        %p180 = scmp.lt.s32.totalorder %s21, 1
        %s181 = scalar_select %p180, %s21, 1
        %s182 = smul.addr %s181, 8
        %s183 = scalar_lea.vmem %s1, %s182
        %p184 = scmp.lt.s32.totalorder %s21, 1
        %s185 = scalar_select %p184, %s21, 1
        %s186 = smul.addr %s185, 8
        %s187 = scalar_lea.vmem %s2, %s186
        %p188 = scmp.eq.s32.totalorder %s22, 0
        // Predicated region
        $region29: #{greedy_head.1} parent=23 // pred_check
          %p189 = pneg %p188
        $region30: #{greedy_head.1} parent=23 // pred_check_branch
          %191 = sbr.rel (%p189) target = $region32
        $region31: #{greedy_head.1} parent=23 // pred_region
          %vm192 = vcmask 7168
          %193 = vst.msk [vmem:[#allocation2] sm:$0xff] %vm192, -inf
          %194 = vst.msk [vmem:[#allocation3] sm:$0xff] %vm192, 0
        $region32: #{greedy_head.1} parent=23 // pred_fallthru
          _
        %v195 = vld [vmem:[%s154] sm:$0xff]
        %v196 = vld [vmem:[%s154 + $0x8] sm:$0xff]
        %v197 = vld [vmem:[%s154 + $0x10] sm:$0xff]
        %v198 = vld [vmem:[%s154 + $0x18] sm:$0xff]
        %v199 = vld [vmem:[%s154 + $0x20] sm:$0xff]
        %v200 = vld [vmem:[%s154 + $0x28] sm:$0xff]
        %v201 = vld [vmem:[%s154 + $0x30] sm:$0xff]
        %v202 = vld [vmem:[%s154 + $0x38] sm:$0xff]
        %v203 = vmax.f32 %v195, %v199
        %v204 = vmax.f32 %v196, %v200
        %v205 = vmax.f32 %v197, %v201
        %v206 = vmax.f32 %v198, %v202
        %v207 = vmax.f32 %v203, %v204
        %v208 = vmax.f32 %v205, %v206
        %v209 = vmax.f32 %v207, %v208
        %210 = vmax.xlane.f32.xlu0 %v209
        %v211 = vpop.xlane.xlu0 %210
        %v212 = vlaneseq
        %v213 = vand.u32 %v212, 127
        %v214 = vadd.s32 %v213, 128
        %v215 = vadd.s32 %v213, 256
        %v216 = vadd.s32 %v213, 384
        %v217 = vadd.s32 %v213, 512
        %v218 = vadd.s32 %v213, 640
        %v219 = vadd.s32 %v213, 768
        %v220 = vadd.s32 %v213, 896
        %vm221 = vcmp.eq.f32.partialorder %v195, %v211
        %vm222 = vcmp.eq.f32.partialorder %v196, %v211
        %vm223 = vcmp.eq.f32.partialorder %v197, %v211
        %vm224 = vcmp.eq.f32.partialorder %v198, %v211
        %vm225 = vcmp.eq.f32.partialorder %v199, %v211
        %vm226 = vcmp.eq.f32.partialorder %v200, %v211
        %vm227 = vcmp.eq.f32.partialorder %v201, %v211
        %vm228 = vcmp.eq.f32.partialorder %v202, %v211
        %v229 = vsel %vm221, %v213, 2147483647
        %v230 = vsel %vm222, %v214, 2147483647
        %v231 = vsel %vm223, %v215, 2147483647
        %v232 = vsel %vm224, %v216, 2147483647
        %v233 = vsel %vm225, %v217, 2147483647
        %v234 = vsel %vm226, %v218, 2147483647
        %v235 = vsel %vm227, %v219, 2147483647
        %v236 = vsel %vm228, %v220, 2147483647
        %vm237 = vcmp.lt.s32.totalorder %v229, %v233
        %v238 = vsel %vm237, %v229, %v233
        %vm239 = vcmp.lt.s32.totalorder %v230, %v234
        %v240 = vsel %vm239, %v230, %v234
        %vm241 = vcmp.lt.s32.totalorder %v231, %v235
        %v242 = vsel %vm241, %v231, %v235
        %vm243 = vcmp.lt.s32.totalorder %v232, %v236
        %v244 = vsel %vm243, %v232, %v236
        %vm245 = vcmp.lt.s32.totalorder %v238, %v240
        %v246 = vsel %vm245, %v238, %v240
        %vm247 = vcmp.lt.s32.totalorder %v242, %v244
        %v248 = vsel %vm247, %v242, %v244
        %vm249 = vcmp.lt.s32.totalorder %v246, %v248
        %v250 = vsel %vm249, %v246, %v248
        %v251 = vand.u32 %v250, 65535
        %v252 = vshra.s32 %v250, 16
        %v253 = vcvt.s32.f32 %v251
        %v254 = vcvt.s32.f32 %v252
        %255 = vmin.xlane.f32.xlu0 %v254
        %v256 = vpop.xlane.xlu0 %255
        %vm257 = vcmp.eq.f32.partialorder %v254, %v256
        %v258 = vsel %vm257, %v253, inf
        %259 = vmin.xlane.f32.xlu0 %v258
        %v260 = vpop.xlane.xlu0 %259
        %v261 = vcvt.f32.s32 %v260
        %v262 = vcvt.f32.s32 %v256
        %v263 = vshll.u32 %v262, 16
        %v264 = vadd.s32 %v263, %v261
        %s265 = sadd.s32 %s21, %s22
        %s266 = smul.u32 %s265, 1024
        %v267 = vstv %s266
        %v268 = vadd.s32 %v264, %v267
        %v269 = vld [vmem:[#allocation2] sm:$0xff]
        %vm270 = vcmp.gt.f32.partialorder %v211, %v269
        %v271 = vsel %vm270, %v211, %v269
        %vm272 = vcmask 7168
        %273 = vst.msk [vmem:[#allocation2] sm:$0xff] %vm272, %v271
        %v274 = vld [vmem:[#allocation3] sm:$0xff]
        %v275 = vsel %vm270, %v268, %v274
        %276 = vst.msk [vmem:[#allocation3] sm:$0xff] %vm272, %v275
        // Predicated region
        $region33: #{greedy_head.1} parent=23 // pred_check
          %p277 = pneg %p188
        $region34: #{greedy_head.1} parent=23 // pred_check_branch
          %279 = sbr.rel (%p277) target = $region36
        $region35: #{greedy_head.1} parent=23 // pred_region
          %v280 = vld [vmem:[#allocation2] sm:$0xff]
          %281 = vst.msk [vmem:[%s183] sm:$0xff] %vm272, %v280
          %v282 = vld [vmem:[#allocation3] sm:$0xff]
          %283 = vst.msk [vmem:[%s187] sm:$0xff] %vm272, %v282
        $region36: #{greedy_head.1} parent=23 // pred_fallthru
          _
        %p284 = scmp.lt.s32.totalorder %s21, 1
        %s285 = scalar_select %p284, %s21, 1
        %s286 = smul.addr %s285, 8
        %s287 = scalar_lea.vmem %s1, %s286
        %p288 = scmp.lt.s32.totalorder %s21, 1
        %s289 = scalar_select %p288, %s21, 1
        %s290 = smul.addr %s289, 8
        %s291 = scalar_lea.vmem %s2, %s290
        // Predicated region
        $region37: #{greedy_head.1} parent=23 // pred_check
          %p292 = pneg %p75
        $region38: #{greedy_head.1} parent=23 // pred_check_branch
          %294 = sbr.rel (%p292) target = $region40
        $region39: #{greedy_head.1} parent=23 // pred_region
          _
        $region40: #{greedy_head.1} parent=23 // pred_fallthru
          _
        // Predicated region
        $region41: #{greedy_head.1} parent=23 // pred_check
          %p295 = pneg %p101
        $region42: #{greedy_head.1} parent=23 // pred_check_branch
          %297 = sbr.rel (%p295) target = $region44
        $region43: #{greedy_head.1} parent=23 // pred_region
          _
        $region44: #{greedy_head.1} parent=23 // pred_fallthru
          _
      $region24: #{greedy_head.1} parent=5 // pred_fallthru
        _
      %p298 = scmp.le.s32.totalorder 2, %s12
      // Predicated region
      $region45: #{greedy_head.1} parent=5 // pred_check
        %p299 = pneg %p298
      $region46: #{greedy_head.1} parent=5 // pred_check_branch
        %301 = sbr.rel (%p299) target = $region48
      $region47: #{greedy_head.1} parent=5 // pred_region
        %s302 = ssub.s32 %s12, 2
        // Predicated region
        $region49: #{greedy_head.1} parent=47 // pred_check
          %p303 = pneg %p81
        $region50: #{greedy_head.1} parent=47 // pred_check_branch
          %305 = sbr.rel (%p303) target = $region52
        $region51: #{greedy_head.1} parent=47 // pred_region
          %p306 = scmp.lt.s32.totalorder %s23, 1
          %s307 = scalar_select %p306, %s23, 1
          %s308 = smul.addr %s307, 8
          %s309 = scalar_lea.vmem %s1, %s308
        $region52: #{greedy_head.1} parent=47 // pred_fallthru
          _
        // Predicated region
        $region53: #{greedy_head.1} parent=47 // pred_check
          %p310 = pneg %p107
        $region54: #{greedy_head.1} parent=47 // pred_check_branch
          %312 = sbr.rel (%p310) target = $region56
        $region55: #{greedy_head.1} parent=47 // pred_region
          %p313 = scmp.lt.s32.totalorder %s23, 1
          %s314 = scalar_select %p313, %s23, 1
          %s315 = smul.addr %s314, 8
          %s316 = scalar_lea.vmem %s2, %s315
        $region56: #{greedy_head.1} parent=47 // pred_fallthru
          _
      $region48: #{greedy_head.1} parent=5 // pred_fallthru
        _
    $region6: #{greedy_head.1} parent=1 // loop_footer
      %s16 = sadd.s32 1, %s12
    $region7: #{greedy_head.1} parent=1 // loop_footer_branch
      %11 = sbr.rel target = $region3
    $region8: #{greedy_head.1} parent=1 // loop_exit
      _
    %317 = vsyncpa [#allocation5], 1
    %s318 = scalar_lea.sflag [#allocation5], 1
    %319 = vsyncpa %s318, 1

</llo_original>
